<compile_context>
chip_gen: v5e
topology: v5e:2x2
jax: 0.10.0
libtpu: 0.0.40
codegen_flags: <defaults>
</compile_context>

<pallas_src>
import jax
import jax.numpy as jnp
from jax.experimental import pallas as pl
from jax.experimental.pallas import tpu as pltpu


def _scale_mul_kernel(s_ref, x_ref, o_ref):
    # s_ref: (1, tc, 1)   per-channel scale (values in {0, 0.5, 1}), x dtype
    # x_ref: (1, tc, tn)  activation tile
    # o_ref: (1, tc, tn)  output tile
    o_ref[...] = x_ref[...] * s_ref[...]


def _ste_scale(mask_flat):
    """Forward value of the PyTorch STE block -> (sign(mask)+1)/2.

    Kept with the same stop_gradient structure as the module so a future
    custom_vjp can reuse it; computed on the tiny (C,) mask in the wrapper.
    """
    m = mask_flat.astype(jnp.float32)
    out_forward = jnp.sign(m)
    mask1 = (m < -1.0).astype(jnp.float32)
    mask2 = (m < 0.0).astype(jnp.float32)
    mask3 = (m < 1.0).astype(jnp.float32)
    out1 = -1.0 * mask1 + (m * m + 2.0 * m) * (1.0 - mask1)
    out2 = out1 * mask2 + (-m * m + 2.0 * m) * (1.0 - mask2)
    out3 = out2 * mask3 + 1.0 * (1.0 - mask3)
    out = (jax.lax.stop_gradient(out_forward)
           - jax.lax.stop_gradient(out3) + out3)
    return (out + 1.0) * 0.5


def _choose_tiles(C, HW, itemsize, max_block_bytes):
    """Pick (tc, tn) for an x block of shape (1, tc, tn) capped at max_block_bytes."""
    sub = max(8, 32 // itemsize)          # sublane packing: 8 f32, 16 bf16, 32 i8
    # Whole (C, HW) slab fits -> single full block per batch element.
    if C * HW * itemsize <= max_block_bytes:
        return C, HW
    # Keep full HW rows (lane-dense, no masked tail stores); tile channels.
    tc_fit = max_block_bytes // (HW * itemsize)
    if tc_fit >= sub:
        return min(C, (tc_fit // sub) * sub), HW
    # HW too large even for a minimal channel slab: tile HW in 128-lane chunks.
    tc = min(C, sub)
    tn = max(128, (max_block_bytes // (tc * itemsize)) // 128 * 128)
    return tc, min(tn, HW)


def mask_forward(x, mask, finding_masks=True, *,
                 max_block_bytes=8 * 1024 * 1024,
                 vmem_limit_bytes=48 * 1024 * 1024):
    """x: (N, C, H, W), mask: (1, C, 1, 1).  Returns x scaled per channel."""
    if not finding_masks:
        return x

    N, C, H, W = x.shape
    HW = H * W
    dtype = x.dtype
    itemsize = jnp.dtype(dtype).itemsize

    # Per-channel scale {0, 0.5, 1} (exact in bf16), tiny (1, C, 1) array.
    scale = _ste_scale(mask.reshape(C)).astype(dtype).reshape(1, C, 1)

    x3d = x.reshape(N, C, HW)            # contiguous-dim collapse: no data movement

    tc, tn = _choose_tiles(C, HW, itemsize, max_block_bytes)
    grid = (pl.cdiv(C, tc), N, pl.cdiv(HW, tn))   # channel axis outermost: scale DMA reused

    out3d = pl.pallas_call(
        _scale_mul_kernel,
        out_shape=jax.ShapeDtypeStruct((N, C, HW), dtype),
        grid_spec=pltpu.PrefetchScalarGridSpec(
            num_scalar_prefetch=0,
            grid=grid,
            in_specs=[
                pl.BlockSpec((1, tc, 1), lambda c, n, h: (0, c, 0)),   # per-channel scale
                pl.BlockSpec((1, tc, tn), lambda c, n, h: (n, c, h)),  # activations
            ],
            out_specs=pl.BlockSpec((1, tc, tn), lambda c, n, h: (n, c, h)),
        ),
        compiler_params=pltpu.CompilerParams(
            dimension_semantics=("parallel", "parallel", "parallel"),
            vmem_limit_bytes=vmem_limit_bytes,
        ),
        cost_estimate=pl.CostEstimate(
            flops=N * C * HW,
            transcendentals=0,
            bytes_accessed=2 * N * C * HW * itemsize + C * itemsize,
        ),
    )(scale, x3d)

    return out3d.reshape(N, C, H, W)


if __name__ == "__main__":
    key = jax.random.PRNGKey(0)
    k_mask, k_x = jax.random.split(key)

    N, C, H, W = 2, 4, 16, 16
    # Parameter init mirrors nn.Parameter(torch.randn(size) * 0.001)
    mask_param = jax.random.normal(k_mask, (1, C, 1, 1), dtype=jnp.float32) * 0.001
    x = jax.random.normal(k_x, (N, C, H, W), dtype=jnp.float32)
    scale_ref = (jnp.sign(mask_param) + 1.0) * 0.5

    # f32 path (single full block per batch element)
    y = jax.block_until_ready(mask_forward(x, mask_param, finding_masks=True))
    assert y.dtype == x.dtype
    assert jnp.allclose(y, scale_ref * x, atol=1e-6), "f32 mismatch vs reference"

    # bf16 path (native-dtype streaming, scale {0,0.5,1} exact in bf16)
    x_bf16 = x.astype(jnp.bfloat16)
    y_bf16 = jax.block_until_ready(mask_forward(x_bf16, mask_param))
    assert y_bf16.dtype == jnp.bfloat16
    assert jnp.allclose(y_bf16.astype(jnp.float32),
                        (scale_ref.astype(jnp.bfloat16) * x_bf16).astype(jnp.float32),
                        atol=1e-2), "bf16 mismatch vs reference"

    # Ragged channel tiling (tc < C, C % tc != 0 -> Pallas-masked last block)
    C2 = 20
    mask2 = jax.random.normal(k_mask, (1, C2, 1, 1), dtype=jnp.float32) * 0.001
    x2 = jax.random.normal(k_x, (2, C2, 16, 16), dtype=jnp.float32)
    y2 = jax.block_until_ready(mask_forward(x2, mask2, max_block_bytes=16 * 1024))
    assert jnp.allclose(y2, (jnp.sign(mask2) + 1.0) * 0.5 * x2, atol=1e-6), \
        "ragged-channel mismatch vs reference"

    # Ragged lane tiling (tn < HW, HW % tn != 0 -> masked tail lane block)
    mask3 = jax.random.normal(k_mask, (1, 8, 1, 1), dtype=jnp.float32) * 0.001
    x3 = jax.random.normal(k_x, (1, 8, 20, 20), dtype=jnp.float32)
    y3 = jax.block_until_ready(mask_forward(x3, mask3, max_block_bytes=4 * 1024))
    assert jnp.allclose(y3, (jnp.sign(mask3) + 1.0) * 0.5 * x3, atol=1e-6), \
        "ragged-lane mismatch vs reference"

    # finding_masks=False passthrough
    assert jnp.array_equal(mask_forward(x, mask_param, finding_masks=False), x)

    print("KERNEL_OK")
</pallas_src>

<mosaic_0001>
module attributes {stable_mosaic.version = 11 : i64} {
  func.func @_scale_mul_kernel(%arg0: i32, %arg1: i32, %arg2: i32, %arg3: memref<1x4x1xf32, #tpu.memory_space<vmem>>, %arg4: memref<1x4x256xf32, #tpu.memory_space<vmem>>, %arg5: memref<1x4x256xf32, #tpu.memory_space<vmem>>) attributes {dimension_semantics = [#tpu.dimension_semantics<parallel>, #tpu.dimension_semantics<parallel>, #tpu.dimension_semantics<parallel>], iteration_bounds = array<i64: 1, 2, 1>, scalar_prefetch = 0 : i64, scratch_operands = 0 : i64, tpu.core_type = #tpu.core_type<tc>, window_params = [{transform_indices = @transform_0, window_bounds = array<i64: 1, 4, 1>}, {transform_indices = @transform_1, window_bounds = array<i64: 1, 4, 256>}, {transform_indices = @transform_2, window_bounds = array<i64: 1, 4, 256>}]} {
    %c0 = arith.constant 0 : index
    %c0_0 = arith.constant 0 : index
    %c0_1 = arith.constant 0 : index
    %0 = vector.load %arg4[%c0, %c0_0, %c0_1] : memref<1x4x256xf32, #tpu.memory_space<vmem>>, vector<1x4x256xf32>
    %c0_2 = arith.constant 0 : index
    %c0_3 = arith.constant 0 : index
    %c0_4 = arith.constant 0 : index
    %1 = vector.load %arg3[%c0_2, %c0_3, %c0_4] : memref<1x4x1xf32, #tpu.memory_space<vmem>>, vector<1x4x1xf32>
    %2 = vector.broadcast %1 : vector<1x4x1xf32> to vector<1x4x256xf32>
    %3 = arith.mulf %0, %2 : vector<1x4x256xf32>
    %c0_5 = arith.constant 0 : index
    %c0_6 = arith.constant 0 : index
    %c0_7 = arith.constant 0 : index
    %4 = vector.load %arg5[%c0_5, %c0_6, %c0_7] : memref<1x4x256xf32, #tpu.memory_space<vmem>>, vector<1x4x256xf32>
    tpu.vector_store %arg5[%c0_5, %c0_6, %c0_7], %3 {strides = array<i32>} : memref<1x4x256xf32, #tpu.memory_space<vmem>>, vector<1x4x256xf32>,
    return
  }
  func.func @transform_0(%arg0: i32, %arg1: i32, %arg2: i32) -> (i32, i32, i32) {
    %c0_i32 = arith.constant 0 : i32
    %c0_i32_0 = arith.constant 0 : i32
    %c0_i32_1 = arith.constant 0 : i32
    return %c0_i32, %arg0, %c0_i32_0 : i32, i32, i32
  }
  func.func @transform_1(%arg0: i32, %arg1: i32, %arg2: i32) -> (i32, i32, i32) {
    %c0_i32 = arith.constant 0 : i32
    return %arg1, %arg0, %arg2 : i32, i32, i32
  }
  func.func @transform_2(%arg0: i32, %arg1: i32, %arg2: i32) -> (i32, i32, i32) {
    %c0_i32 = arith.constant 0 : i32
    return %arg1, %arg0, %arg2 : i32, i32, i32
  }
}

</mosaic_0001>

<llo_original>
// kernel: tpu_custom_call.1
$region0: #{tpu_custom_call.1}
  #allocation0 [shape = 'u32[]', space=smem, size = 0x4, offset = 0x4, fixed_abs, tag = 'smem constant byte address 0x4 - core index']
  #allocation1 [shape = 'u32[72,128]{1,0:T(1,128)}', space=vmem, size = 0x9000, scoped, tag = 'internal scratch']
  %s0 = inlined_call_operand.vmem [shape: f32[1,4,1], index: 0, kind: input, shape index: {}]
  %s1 = inlined_call_operand.hbm [shape: f32[2,4,256], index: 1, kind: input, shape index: {}]
  %s2 = inlined_call_operand.hbm [shape: f32[2,4,256], index: 2, kind: output, shape index: {}]
  %s3 = sld [smem:[#allocation0]]
  $region45: #{tpu_custom_call.1} parent=0
    _
  %s5 = ssub.s32 1, %s3
  %s6 = scalar_select 0, %s5, %s3
  $region1: #{tpu_custom_call.1} parent=0
    #allocation2 [shape = 'u8[8192]{0}', space=vmem, size = 0x2000, scoped, tag = 'input window, operand 1']
    #allocation3 [shape = 's32[2]{0}', space=sflag, size = 0x8, scoped, tag = 'scoped memory for tpu_custom_call.1']
    #allocation4 [shape = 's32[2]{0}', space=sflag, size = 0x8, scoped, tag = 'scoped memory for tpu_custom_call.1']
    #allocation5 [shape = 'u8[8192]{0}', space=vmem, size = 0x2000, scoped, tag = 'output window, operand 0']
    %7 = vsyncpa [#allocation3], 0
    %s8 = scalar_lea.sflag [#allocation3], 1
    %9 = vsyncpa %s8, 0
    %10 = vsyncpa [#allocation4], 0
    %s11 = scalar_lea.sflag [#allocation4], 1
    %12 = vsyncpa %s11, 0
    loop: start=0, step=1, limit=4
    $region2: #{tpu_custom_call.1} parent=1 // loop_pre_header
      _
    $region3: #{tpu_custom_call.1} parent=1 // loop_header
      %s14 = sphi 0, %s18
      %p15 = scmp.ge.s32.totalorder %s14, 4
      %s21 = sphi 0, %s40
      %s22 = sphi 0, %s36
      %s23 = sphi 0, %s32
      %s24 = sphi 0, %s21
      %s25 = sphi 0, %s22
      %s26 = sphi 0, %s23
      %s27 = sphi 0, %s24
      %s28 = sphi 0, %s25
      %s29 = sphi 0, %s26
      %s43 = sphi 0, %s45
      %s46 = sphi 0, %s43
      %s47 = sphi 0, %s46
      %s63 = sphi 0, %s47
      %s73 = sphi 0, %s75
      %s76 = sphi 0, %s73
      %s77 = sphi 0, %s76
      %s93 = sphi 0, %s77
      %s103 = sphi 0, %s105
      %s106 = sphi 0, %s103
      %s107 = sphi 0, %s106
      %s123 = sphi 0, %s107
    $region4: #{tpu_custom_call.1} parent=1 // loop_header_branch
      %17 = sbr.rel (%p15) target = $region8
    $region5: #{tpu_custom_call.1} parent=1 // loop_body
      %s19 = ssub.s32 %s14, 1
      %s20 = ssub.s32 %s14, 2
      %s30 = sadd.s32 1, %s23
      %p31 = scmp.ge.s32.totalorder %s30, 1
      %s32 = scalar_select %p31, 0, %s30
      %s33 = sadd.s32 1, %s22
      %s34 = scalar_select %p31, %s33, %s22
      %p35 = scmp.ge.s32.totalorder %s34, 2
      %s36 = scalar_select %p35, 0, %s34
      %s37 = sadd.s32 1, %s21
      %s38 = scalar_select %p35, %s37, %s21
      %p39 = scmp.ge.s32.totalorder %s38, 1
      %s40 = scalar_select %p39, 0, %s38
      %s41 = ssub.s32 %s21, %s40
      %p42 = scmp.eq.s32.totalorder %s41, 0
      %s44 = sadd.s32 %s43, 1
      %s45 = scalar_select %p42, %s43, %s44
      %p48 = pneg %p42
      %p49 = scmp.eq.s32.totalorder %s14, 1
      %p50 = por %p48, %p49
      %p51 = scmp.ne.s32.totalorder %s43, %s46
      %p52 = scmp.eq.s32.totalorder %s14, 0
      %p53 = por %p51, %p52
      %p54 = scmp.ne.s32.totalorder %s43, %s46
      %p55 = scmp.eq.s32.totalorder %s19, 1
      %p56 = por %p54, %p55
      %p57 = scmp.ne.s32.totalorder %s46, %s47
      %p58 = scmp.eq.s32.totalorder %s19, 0
      %p59 = por %p57, %p58
      %p60 = scmp.ne.s32.totalorder %s46, %s47
      %p61 = scmp.eq.s32.totalorder %s20, 1
      %p62 = por %p60, %p61
      %p64 = scmp.ne.s32.totalorder %s47, %s63
      %p65 = scmp.eq.s32.totalorder %s20, 0
      %p66 = por %p64, %p65
      %s67 = ssub.s32 %s22, %s36
      %s68 = ssub.s32 %s21, %s40
      %s69 = sor.u32 %s67, %s68
      %s70 = ssub.s32 %s23, %s32
      %s71 = sor.u32 %s69, %s70
      %p72 = scmp.eq.s32.totalorder %s71, 0
      %s74 = sadd.s32 %s73, 1
      %s75 = scalar_select %p72, %s73, %s74
      %p78 = pneg %p72
      %p79 = scmp.eq.s32.totalorder %s14, 1
      %p80 = por %p78, %p79
      %p81 = scmp.ne.s32.totalorder %s73, %s76
      %p82 = scmp.eq.s32.totalorder %s14, 0
      %p83 = por %p81, %p82
      %p84 = scmp.ne.s32.totalorder %s73, %s76
      %p85 = scmp.eq.s32.totalorder %s19, 1
      %p86 = por %p84, %p85
      %p87 = scmp.ne.s32.totalorder %s76, %s77
      %p88 = scmp.eq.s32.totalorder %s19, 0
      %p89 = por %p87, %p88
      %p90 = scmp.ne.s32.totalorder %s76, %s77
      %p91 = scmp.eq.s32.totalorder %s20, 1
      %p92 = por %p90, %p91
      %p94 = scmp.ne.s32.totalorder %s77, %s93
      %p95 = scmp.eq.s32.totalorder %s20, 0
      %p96 = por %p94, %p95
      %s97 = ssub.s32 %s22, %s36
      %s98 = ssub.s32 %s21, %s40
      %s99 = sor.u32 %s97, %s98
      %s100 = ssub.s32 %s23, %s32
      %s101 = sor.u32 %s99, %s100
      %p102 = scmp.eq.s32.totalorder %s101, 0
      %s104 = sadd.s32 %s103, 1
      %s105 = scalar_select %p102, %s103, %s104
      %p108 = pneg %p102
      %p109 = scmp.eq.s32.totalorder %s14, 1
      %p110 = por %p108, %p109
      %p111 = scmp.ne.s32.totalorder %s103, %s106
      %p112 = scmp.eq.s32.totalorder %s14, 0
      %p113 = por %p111, %p112
      %p114 = scmp.ne.s32.totalorder %s103, %s106
      %p115 = scmp.eq.s32.totalorder %s19, 1
      %p116 = por %p114, %p115
      %p117 = scmp.ne.s32.totalorder %s106, %s107
      %p118 = scmp.eq.s32.totalorder %s19, 0
      %p119 = por %p117, %p118
      %p120 = scmp.ne.s32.totalorder %s106, %s107
      %p121 = scmp.eq.s32.totalorder %s20, 1
      %p122 = por %p120, %p121
      %p124 = scmp.ne.s32.totalorder %s107, %s123
      %p125 = scmp.eq.s32.totalorder %s20, 0
      %p126 = por %p124, %p125
      %p127 = scmp.le.s32.totalorder 1, %s14
      %p128 = scmp.lt.s32.totalorder %s14, 3
      %p129 = pnand %p127, %p128
      %p130 = pneg %p129
      // Predicated region
      $region9: #{tpu_custom_call.1} parent=5 // pred_check
        _
      $region10: #{tpu_custom_call.1} parent=5 // pred_check_branch
        %132 = sbr.rel (%p129) target = $region12
      $region11: #{tpu_custom_call.1} parent=5 // pred_region
        %s133 = ssub.s32 %s14, 1
        // Predicated region
        $region13: #{tpu_custom_call.1} parent=11 // pred_check
          %p134 = pneg %p59
        $region14: #{tpu_custom_call.1} parent=11 // pred_check_branch
          %136 = sbr.rel (%p134) target = $region16
        $region15: #{tpu_custom_call.1} parent=11 // pred_region
          %p137 = scmp.lt.s32.totalorder %s24, 0
          %s138 = scalar_select %p137, %s24, 0
          %s139 = smul.addr %s138, 4
          %s140 = scalar_lea.vmem %s0, %s139
        $region16: #{tpu_custom_call.1} parent=11 // pred_fallthru
          _
      $region12: #{tpu_custom_call.1} parent=5 // pred_fallthru
        _
      %p141 = scmp.lt.s32.totalorder %s14, 2
      // Predicated region
      $region17: #{tpu_custom_call.1} parent=5 // pred_check
        %p142 = pneg %p141
      $region18: #{tpu_custom_call.1} parent=5 // pred_check_branch
        %144 = sbr.rel (%p142) target = $region20
      $region19: #{tpu_custom_call.1} parent=5 // pred_region
        // Predicated region
        $region21: #{tpu_custom_call.1} parent=19 // pred_check
          %p145 = pneg %p83
        $region22: #{tpu_custom_call.1} parent=19 // pred_check_branch
          %147 = sbr.rel (%p145) target = $region24
        $region23: #{tpu_custom_call.1} parent=19 // pred_region
          %s148 = sand.u32 %s73, 1
          %s149 = scalar_lea.sflag [#allocation3], %s148
          %s150 = sand.u32 %s73, 1
          %s151 = smul.addr %s150, 8
          %s152 = scalar_lea.vmem [#allocation2], %s151
          %s153 = smul.u32 2, %s23
          %155 = vsyncadd %s149, 0
          %s156 = smul.addr %s21, 2
          %s157 = sadd.s32 %s153, %s156
          %s158 = smul.addr %s22, 2
          %s159 = sadd.s32 %s157, %s158
          %s160 = smul.addr %s159, 4
          %s161 = scalar_lea.hbm %s1, %s160
          %s163 = sshll.u32 %s161, 4
          %s164 = int_to_ptr.hbm [resolvable:$true] %s163
          %s165 = sshll.u32 %s152, 4
          %s166 = int_to_ptr.vmem [resolvable:$true] %s165
          %168 = dma.hbm_to_vmem [thread:$0]  %s164, 128, %s166, %s149
        $region24: #{tpu_custom_call.1} parent=19 // pred_fallthru
          _
      $region20: #{tpu_custom_call.1} parent=5 // pred_fallthru
        _
      %p169 = scmp.le.s32.totalorder 1, %s14
      %p170 = scmp.lt.s32.totalorder %s14, 3
      %p171 = pnand %p169, %p170
      %p172 = pneg %p171
      // Predicated region
      $region25: #{tpu_custom_call.1} parent=5 // pred_check
        _
      $region26: #{tpu_custom_call.1} parent=5 // pred_check_branch
        %174 = sbr.rel (%p171) target = $region28
      $region27: #{tpu_custom_call.1} parent=5 // pred_region
        %s175 = ssub.s32 %s14, 1
        %s176 = sand.u32 %s76, 1
        %s177 = scalar_lea.sflag [#allocation3], %s176
        %s178 = sand.u32 %s76, 1
        %s179 = smul.addr %s178, 8
        %s180 = scalar_lea.vmem [#allocation2], %s179
        // Predicated region
        $region29: #{tpu_custom_call.1} parent=27 // pred_check
          %p181 = pneg %p89
        $region30: #{tpu_custom_call.1} parent=27 // pred_check_branch
          %183 = sbr.rel (%p181) target = $region32
        $region31: #{tpu_custom_call.1} parent=27 // pred_region
          %185 = dma.done %s177, 128
        $region32: #{tpu_custom_call.1} parent=27 // pred_fallthru
          _
        %p186 = scmp.lt.s32.totalorder %s24, 0
        %s187 = scalar_select %p186, %s24, 0
        %s188 = smul.addr %s187, 4
        %s189 = scalar_lea.vmem %s0, %s188
        %p190 = pneg %p59
        %p191 = pneg %p56
        %s192 = sand.u32 %s76, 1
        %s193 = scalar_lea.sflag [#allocation3], %s192
        %s194 = sand.u32 %s76, 1
        %s195 = smul.addr %s194, 8
        %s196 = scalar_lea.vmem [#allocation2], %s195
        %p197 = pneg %p89
        %p198 = pneg %p86
        %p199 = pneg %p119
        %p200 = pneg %p116
        %s201 = sand.u32 %s106, 1
        %s202 = scalar_lea.sflag [#allocation4], %s201
        %s203 = sand.u32 %s106, 1
        %s204 = smul.addr %s203, 8
        %s205 = scalar_lea.vmem [#allocation5], %s204
        %p206 = scmp.lt.s32.totalorder %s24, 0
        %s207 = scalar_select %p206, %s24, 0
        %s208 = smul.addr %s207, 4
        %s209 = scalar_lea.vmem %s0, %s208
        %s210 = smul.u32 2, %s26
        %s211 = smul.u32 2, %s26
        %v212 = vld [vmem:[%s180] sm:$0xff]
        %v213 = vld [vmem:[%s209] sm:$0xf]
        %215 = vset.pattern.permute.xlu0 0
        %216 = vperm.xlu0 %215, %v213
        %v217 = vpop.permute.xlu0 %216
        %v219 = vunpack.c.l.s4 839922192
        %v220 = vunpack.c.0.s8 %v219
        %v221 = vperm.slane %v217, %v220
        %v223 = vmul.f32 %v212, %v221
        %224 = vst [vmem:[%s205] sm:$0xff] %v223
        %s225 = sand.u32 %s106, 1
        %s226 = scalar_lea.sflag [#allocation4], %s225
        %s227 = sand.u32 %s106, 1
        %s228 = smul.addr %s227, 8
        %s229 = scalar_lea.vmem [#allocation5], %s228
        // Predicated region
        $region33: #{tpu_custom_call.1} parent=27 // pred_check
          %p230 = pneg %p116
        $region34: #{tpu_custom_call.1} parent=27 // pred_check_branch
          %232 = sbr.rel (%p230) target = $region36
        $region35: #{tpu_custom_call.1} parent=27 // pred_region
          %s233 = smul.u32 2, %s26
          %235 = vsyncadd %s226, 0
          %s236 = smul.addr %s24, 2
          %s237 = sadd.s32 %s233, %s236
          %s238 = smul.addr %s25, 2
          %s239 = sadd.s32 %s237, %s238
          %s240 = smul.addr %s239, 4
          %s241 = scalar_lea.hbm %s2, %s240
          %s243 = sshll.u32 %s229, 4
          %s244 = int_to_ptr.vmem [resolvable:$true] %s243
          %s245 = sshll.u32 %s241, 4
          %s246 = int_to_ptr.hbm [resolvable:$true] %s245
          %248 = dma.vmem_to_hbm [thread:$0]  %s244, 128, %s246, %s226
        $region36: #{tpu_custom_call.1} parent=27 // pred_fallthru
          _
      $region28: #{tpu_custom_call.1} parent=5 // pred_fallthru
        _
      %p249 = scmp.le.s32.totalorder 2, %s14
      // Predicated region
      $region37: #{tpu_custom_call.1} parent=5 // pred_check
        %p250 = pneg %p249
      $region38: #{tpu_custom_call.1} parent=5 // pred_check_branch
        %252 = sbr.rel (%p250) target = $region40
      $region39: #{tpu_custom_call.1} parent=5 // pred_region
        %s253 = ssub.s32 %s14, 2
        // Predicated region
        $region41: #{tpu_custom_call.1} parent=39 // pred_check
          %p254 = pneg %p122
        $region42: #{tpu_custom_call.1} parent=39 // pred_check_branch
          %256 = sbr.rel (%p254) target = $region44
        $region43: #{tpu_custom_call.1} parent=39 // pred_region
          %s257 = sand.u32 %s107, 1
          %s258 = scalar_lea.sflag [#allocation4], %s257
          %s259 = sand.u32 %s107, 1
          %s260 = smul.addr %s259, 8
          %s261 = scalar_lea.vmem [#allocation5], %s260
          %263 = dma.done %s258, 128
        $region44: #{tpu_custom_call.1} parent=39 // pred_fallthru
          _
      $region40: #{tpu_custom_call.1} parent=5 // pred_fallthru
        _
    $region6: #{tpu_custom_call.1} parent=1 // loop_footer
      %s18 = sadd.s32 1, %s14
    $region7: #{tpu_custom_call.1} parent=1 // loop_footer_branch
      %13 = sbr.rel target = $region3
    $region8: #{tpu_custom_call.1} parent=1 // loop_exit
      _
    %264 = vsyncpa [#allocation3], 1
    %s265 = scalar_lea.sflag [#allocation3], 1
    %266 = vsyncpa %s265, 1
    %267 = vsyncpa [#allocation4], 1
    %s268 = scalar_lea.sflag [#allocation4], 1
    %269 = vsyncpa %s268, 1

</llo_original>
